<compile_context>
chip_gen: v7x
topology: tpu7x:2x2x1
jax: 0.10.0
libtpu: 0.0.40
codegen_flags: <defaults>
</compile_context>

<pallas_src>
import math

import jax
import jax.numpy as jnp
from jax.experimental import pallas as pl
from jax.experimental.pallas import tpu as pltpu


def _round_up(x: int, m: int) -> int:
    return ((x + m - 1) // m) * m


def _make_eca_kernel(k: int, hw_total: int, hw_tile: int):
    pad = k // 2
    rem = hw_total % hw_tile          # static: valid lanes in the ragged tail
    needs_hw_mask = rem != 0
    inv_hw = 1.0 / float(hw_total)

    def eca_kernel(w_ref, x_ref, o_ref, acc_ref, pad_ref):
        # w_ref:   SMEM (k,) f32               -- Conv1d(1,1,k,bias=False) taps
        # x_ref:   VMEM (n_t, C, hw_tile)      -- current spatial tile of x
        # o_ref:   VMEM (n_t, C)               -- sigmoid channel gates
        # acc_ref: VMEM (n_t, C) f32           -- running channel sums (aligned)
        # pad_ref: VMEM (n_t, C + 2*pad) f32   -- finalize-only zero-padded copy
        h = pl.program_id(1)
        last = pl.num_programs(1) - 1
        n_t, c = o_ref.shape

        @pl.when(h == 0)
        def _init():
            acc_ref[...] = jnp.zeros_like(acc_ref)

        def _accumulate(x):
            # Lane-aligned full-ref accumulate: plain vadd + vst every step.
            acc_ref[...] += jnp.sum(x, axis=-1)

        if needs_hw_mask:
            # Only the LAST HW tile is ragged; keep the mask off the hot path.
            @pl.when(h != last)
            def _full_tile():
                _accumulate(x_ref[...].astype(jnp.float32))

            @pl.when(h == last)
            def _ragged_tile():
                x = x_ref[...].astype(jnp.float32)
                hw_idx = jax.lax.broadcasted_iota(jnp.int32, x.shape, 2)
                _accumulate(jnp.where(hw_idx < rem, x, 0.0))
        else:
            _accumulate(x_ref[...].astype(jnp.float32))

        @pl.when(h == last)
        def _finalize():
            # AdaptiveAvgPool2d(1): mean over H*W (applied once, after summing).
            pooled = acc_ref[...] * inv_hw
            # Zero-padded 1-D cross-correlation over channels:
            #   y[c] = sum_j w[j] * pooled[c + j - pad]   (zeros outside [0, C))
            # exactly matching torch's Conv1d zero padding.
            pad_ref[...] = jnp.zeros_like(pad_ref)
            pad_ref[:, pad:pad + c] = pooled
            y = jnp.zeros((n_t, c), jnp.float32)
            for j in range(k):                      # k is tiny and static
                y = y + w_ref[j] * pad_ref[:, j:j + c]
            o_ref[...] = jax.nn.sigmoid(y).astype(o_ref.dtype)

    return eca_kernel


def _pick_tiles(N: int, C: int, HW: int, itemsize: int,
                *, max_block_bytes: int) -> tuple[int, int]:
    """Prefer contiguous full-(C,HW) rows; grow the batch tile to the budget.

    max_block_bytes is the budget for ONE input block (double-buffered by the
    pipeline).  16 MiB is a good default for v7x (64 MiB VMEM, 3.2 TB/s) and
    v6e; v5e would also be fine with 8 MiB but 16 MiB costs nothing there.
    """
    base_n = N if N < 8 else 8          # output block's 2nd-to-last dim rule
    row_bytes = C * HW * itemsize       # one batch row, contiguous in HBM

    if base_n * row_bytes <= max_block_bytes:
        # Full-HW rows fit: one contiguous DMA per batch row.
        hw_tile = HW
        if N < 8:
            n_tile = N
        else:
            n_tile = 8 * max(1, max_block_bytes // (8 * row_bytes))
            n_pad = _round_up(N, 8)
            n_tile = min(n_tile, n_pad)
            # Keep >= 2 batch blocks when possible so the "parallel" axis can
            # shard across TensorCores (v7x has 2 TCs per chip).
            if n_pad >= 16:
                n_tile = min(n_tile, max(8, (n_pad // 2) // 8 * 8))
    else:
        # A single row exceeds the budget: split the flattened spatial axis.
        n_tile = base_n
        if HW <= 128:
            hw_tile = HW
        else:
            lanes = max(max_block_bytes // (n_tile * C * itemsize), 128)
            hw_tile = min((lanes // 128) * 128, (HW // 128) * 128)
            hw_tile = max(hw_tile, 128)
    return n_tile, hw_tile


def _vmem_limit_bytes(n_tile: int, C: int, hw_tile: int, x_itemsize: int,
                      out_itemsize: int, pad: int, n_buffers: int) -> int:
    x_block = n_tile * C * hw_tile * x_itemsize
    out_block = n_tile * C * out_itemsize
    scratch = n_tile * C * 4 + n_tile * (C + 2 * pad) * 4
    need = n_buffers * x_block + 2 * out_block + scratch
    # + headroom for compiler-internal scratch; capped well under v7x's 64 MiB.
    return int(min(max(need + (4 << 20), 32 << 20), 48 << 20))


def efficient_channel_attention(x: jax.Array, w: jax.Array, k: int,
                                *, hw_tile: int | None = None,
                                max_block_bytes: int = 16 << 20) -> jax.Array:
    """x: (N, C, H, W), w: (k,) Conv1d taps. Returns sigmoid gates (N, C, 1, 1)."""
    N, C, H, W = x.shape
    HW = H * W
    pad = k // 2
    x_flat = x.reshape(N, C, HW)      # layout glue only; compute is in-kernel
    w = w.astype(jnp.float32)

    n_tile, auto_hw_tile = _pick_tiles(N, C, HW, x.dtype.itemsize,
                                       max_block_bytes=max_block_bytes)
    if hw_tile is None:
        hw_tile = auto_hw_tile

    n_blocks = pl.cdiv(N, n_tile)
    hw_blocks = pl.cdiv(HW, hw_tile)

    # Many small strided HW blocks expose DMA issue latency: use a 3-deep
    # pipeline there (negligible VMEM: 3 x small block).  No-op for full-HW.
    x_block_bytes = n_tile * C * hw_tile * x.dtype.itemsize
    use_triple = (hw_blocks >= 3) and (x_block_bytes <= (2 << 20))
    n_buffers = 3 if use_triple else 2

    if use_triple:
        x_spec = pl.BlockSpec((n_tile, C, hw_tile), lambda n, h: (n, 0, h),
                              pipeline_mode=pl.Buffered(3))
    else:
        x_spec = pl.BlockSpec((n_tile, C, hw_tile), lambda n, h: (n, 0, h))

    # Bandwidth-dominated op: tell XLA so it can overlap surrounding HLOs.
    cost = pl.CostEstimate(
        flops=N * C * (HW + 2 * k),
        transcendentals=N * C,  # sigmoid
        bytes_accessed=x_flat.size * x_flat.dtype.itemsize
        + w.size * w.dtype.itemsize
        + N * C * x.dtype.itemsize,
    )

    gates = pl.pallas_call(
        _make_eca_kernel(k, HW, hw_tile),
        out_shape=jax.ShapeDtypeStruct((N, C), x.dtype),
        grid=(n_blocks, hw_blocks),
        in_specs=[
            # conv taps: tiny 32-bit table, whole array in SMEM
            pl.BlockSpec(memory_space=pltpu.MemorySpace.SMEM),
            # x: contiguous (C, HW) rows per batch tile; HW split only if huge
            x_spec,
        ],
        # lane-dense output (C last), resident across the HW reduction axis
        out_specs=pl.BlockSpec((n_tile, C), lambda n, h: (n, 0)),
        scratch_shapes=[
            pltpu.VMEM((n_tile, C), jnp.float32),            # running sums
            pltpu.VMEM((n_tile, C + 2 * pad), jnp.float32),  # finalize-only pad
        ],
        compiler_params=pltpu.CompilerParams(
            dimension_semantics=("parallel", "arbitrary"),
            vmem_limit_bytes=_vmem_limit_bytes(
                n_tile, C, hw_tile, x.dtype.itemsize, x.dtype.itemsize,
                pad, n_buffers),
        ),
        cost_estimate=cost,
    )(w, x_flat)

    return gates.reshape(N, C, 1, 1)


def _eca_kernel_size(c: int, b: int = 1, gamma: int = 2) -> int:
    t = int(abs((math.log(c, 2) + b) / gamma))
    return t if t % 2 else t + 1


def _reference(x: jax.Array, w: jax.Array, k: int) -> jax.Array:
    """Pure-JAX replica of the PyTorch forward pass."""
    N, C, H, W = x.shape
    pooled = x.astype(jnp.float32).mean(axis=(2, 3))          # (N, C)
    pad = k // 2
    padded = jnp.pad(pooled, ((0, 0), (pad, pad)))            # Conv1d zero pad
    y = jnp.zeros_like(pooled)
    for j in range(k):
        y = y + w[j] * padded[:, j:j + C]
    return jax.nn.sigmoid(y).reshape(N, C, 1, 1).astype(x.dtype)


if __name__ == "__main__":
    key = jax.random.PRNGKey(0)
    k1, k2, k3, k4 = jax.random.split(key, 4)

    # --- Test 1: default tiling (contiguous full-(C,HW) blocks, 1 HW step) ---
    N, C, H, W = 2, 16, 16, 16
    kk = _eca_kernel_size(C)                 # C=16 -> k=3, padding=1
    x = jax.random.normal(k1, (N, C, H, W), dtype=jnp.float32)
    w = 0.5 * jax.random.normal(k2, (kk,), dtype=jnp.float32)
    out = jax.block_until_ready(efficient_channel_attention(x, w, kk))
    ref = _reference(x, w, kk)
    assert out.shape == (N, C, 1, 1) and out.dtype == x.dtype
    assert jnp.allclose(out, ref, atol=1e-5, rtol=1e-5), "mismatch (test 1)"

    # --- Test 2: forced HW split -> multi-step reduction, ragged last HW tile
    #             (64 valid lanes) and the 3-deep pipelined small-block path ---
    N2, C2, H2, W2 = 3, 8, 16, 20            # HW = 320, hw_tile = 128 -> 3 steps
    kk2 = _eca_kernel_size(C2)               # C=8 -> k=3
    x2 = jax.random.normal(k3, (N2, C2, H2, W2), dtype=jnp.float32)
    w2 = 0.5 * jax.random.normal(k4, (kk2,), dtype=jnp.float32)
    out2 = jax.block_until_ready(
        efficient_channel_attention(x2, w2, kk2, hw_tile=128))
    ref2 = _reference(x2, w2, kk2)
    assert out2.shape == (N2, C2, 1, 1) and out2.dtype == x2.dtype
    assert jnp.allclose(out2, ref2, atol=1e-5, rtol=1e-5), "mismatch (test 2)"

    print("KERNEL_OK")
</pallas_src>

<mosaic_0001>
module attributes {stable_mosaic.version = 11 : i64} {
  func.func @eca_kernel(%arg0: i32, %arg1: i32, %arg2: memref<3xf32, #tpu.memory_space<smem>>, %arg3: memref<2x16x256xf32, #tpu.memory_space<vmem>>, %arg4: memref<2x16xf32, #tpu.memory_space<vmem>>, %arg5: memref<2x16xf32, #tpu.memory_space<vmem>>, %arg6: memref<2x18xf32, #tpu.memory_space<vmem>>) attributes {dimension_semantics = [#tpu.dimension_semantics<parallel>, #tpu.dimension_semantics<arbitrary>], iteration_bounds = array<i64: 1, 1>, scalar_prefetch = 0 : i64, scratch_operands = 2 : i64, tpu.core_type = #tpu.core_type<tc>, window_params = [{transform_indices = @transform_0, window_bounds = array<i64: 3>}, {transform_indices = @transform_1, window_bounds = array<i64: 2, 16, 256>}, {transform_indices = @transform_2, window_bounds = array<i64: 2, 16>}]} {
    %c0_i32 = arith.constant 0 : i32
    %0 = arith.cmpi eq, %arg1, %c0_i32 : i32
    %1 = arith.extui %0 : i1 to i32
    %c0_i32_0 = arith.constant 0 : i32
    %2 = arith.cmpi ne, %1, %c0_i32_0 : i32
    scf.if %2 {
      %cst_9 = arith.constant 0.000000e+00 : f32
      %11 = vector.broadcast %cst_9 : f32 to vector<2x16xf32>
      %c0_10 = arith.constant 0 : index
      %c0_11 = arith.constant 0 : index
      %12 = vector.load %arg5[%c0_10, %c0_11] : memref<2x16xf32, #tpu.memory_space<vmem>>, vector<2x16xf32>
      tpu.vector_store %arg5[%c0_10, %c0_11], %11 {strides = array<i32>} : memref<2x16xf32, #tpu.memory_space<vmem>>, vector<2x16xf32>,
    } else {
    }
    %c0 = arith.constant 0 : index
    %c0_1 = arith.constant 0 : index
    %c0_2 = arith.constant 0 : index
    %3 = vector.load %arg3[%c0, %c0_1, %c0_2] : memref<2x16x256xf32, #tpu.memory_space<vmem>>, vector<2x16x256xf32>
    %c0_3 = arith.constant 0 : index
    %c0_4 = arith.constant 0 : index
    %4 = vector.load %arg5[%c0_3, %c0_4] : memref<2x16xf32, #tpu.memory_space<vmem>>, vector<2x16xf32>
    %cst = arith.constant dense<0.000000e+00> : vector<2x16xf32>
    %5 = vector.multi_reduction <add>, %3, %cst [2] : vector<2x16x256xf32> to vector<2x16xf32>
    %6 = arith.addf %4, %5 : vector<2x16xf32>
    %c0_5 = arith.constant 0 : index
    %c0_6 = arith.constant 0 : index
    %7 = vector.load %arg5[%c0_5, %c0_6] : memref<2x16xf32, #tpu.memory_space<vmem>>, vector<2x16xf32>
    tpu.vector_store %arg5[%c0_5, %c0_6], %6 {strides = array<i32>} : memref<2x16xf32, #tpu.memory_space<vmem>>, vector<2x16xf32>,
    %c0_i32_7 = arith.constant 0 : i32
    %8 = arith.cmpi eq, %arg1, %c0_i32_7 : i32
    %9 = arith.extui %8 : i1 to i32
    %c0_i32_8 = arith.constant 0 : i32
    %10 = arith.cmpi ne, %9, %c0_i32_8 : i32
    scf.if %10 {
      %c0_9 = arith.constant 0 : index
      %c0_10 = arith.constant 0 : index
      %11 = vector.load %arg5[%c0_9, %c0_10] : memref<2x16xf32, #tpu.memory_space<vmem>>, vector<2x16xf32>
      %cst_11 = arith.constant 3.906250e-03 : f32
      %12 = vector.broadcast %cst_11 : f32 to vector<2x16xf32>
      %13 = arith.mulf %11, %12 : vector<2x16xf32>
      %cst_12 = arith.constant 0.000000e+00 : f32
      %14 = vector.broadcast %cst_12 : f32 to vector<2x18xf32>
      %c0_13 = arith.constant 0 : index
      %c0_14 = arith.constant 0 : index
      %15 = vector.load %arg6[%c0_13, %c0_14] : memref<2x18xf32, #tpu.memory_space<vmem>>, vector<2x18xf32>
      tpu.vector_store %arg6[%c0_13, %c0_14], %14 {strides = array<i32>} : memref<2x18xf32, #tpu.memory_space<vmem>>, vector<2x18xf32>,
      %c0_15 = arith.constant 0 : index
      %c1 = arith.constant 1 : index
      %16 = vector.load %arg6[%c0_15, %c1] : memref<2x18xf32, #tpu.memory_space<vmem>>, vector<2x16xf32>
      tpu.vector_store %arg6[%c0_15, %c1], %13 {strides = array<i32>} : memref<2x18xf32, #tpu.memory_space<vmem>>, vector<2x16xf32>,
      %cst_16 = arith.constant 0.000000e+00 : f32
      %17 = vector.broadcast %cst_16 : f32 to vector<2x16xf32>
      %c0_17 = arith.constant 0 : index
      %18 = memref.load %arg2[%c0_17] : memref<3xf32, #tpu.memory_space<smem>>
      %c0_18 = arith.constant 0 : index
      %c0_19 = arith.constant 0 : index
      %19 = vector.load %arg6[%c0_18, %c0_19] : memref<2x18xf32, #tpu.memory_space<vmem>>, vector<2x16xf32>
      %20 = vector.broadcast %18 : f32 to vector<2x16xf32>
      %21 = arith.mulf %20, %19 : vector<2x16xf32>
      %22 = arith.addf %17, %21 : vector<2x16xf32>
      %c1_20 = arith.constant 1 : index
      %23 = memref.load %arg2[%c1_20] : memref<3xf32, #tpu.memory_space<smem>>
      %c0_21 = arith.constant 0 : index
      %c1_22 = arith.constant 1 : index
      %24 = vector.load %arg6[%c0_21, %c1_22] : memref<2x18xf32, #tpu.memory_space<vmem>>, vector<2x16xf32>
      %25 = vector.broadcast %23 : f32 to vector<2x16xf32>
      %26 = arith.mulf %25, %24 : vector<2x16xf32>
      %27 = arith.addf %22, %26 : vector<2x16xf32>
      %c2 = arith.constant 2 : index
      %28 = memref.load %arg2[%c2] : memref<3xf32, #tpu.memory_space<smem>>
      %c0_23 = arith.constant 0 : index
      %c2_24 = arith.constant 2 : index
      %29 = vector.load %arg6[%c0_23, %c2_24] : memref<2x18xf32, #tpu.memory_space<vmem>>, vector<2x16xf32>
      %30 = vector.broadcast %28 : f32 to vector<2x16xf32>
      %31 = arith.mulf %30, %29 : vector<2x16xf32>
      %32 = arith.addf %27, %31 : vector<2x16xf32>
      %33 = arith.negf %32 : vector<2x16xf32>
      %34 = math.exp %33 : vector<2x16xf32>
      %cst_25 = arith.constant 1.000000e+00 : f32
      %35 = vector.broadcast %cst_25 : f32 to vector<2x16xf32>
      %36 = arith.addf %35, %34 : vector<2x16xf32>
      %37 = arith.divf %35, %36 : vector<2x16xf32>
      %c0_26 = arith.constant 0 : index
      %c0_27 = arith.constant 0 : index
      %38 = vector.load %arg4[%c0_26, %c0_27] : memref<2x16xf32, #tpu.memory_space<vmem>>, vector<2x16xf32>
      tpu.vector_store %arg4[%c0_26, %c0_27], %37 {strides = array<i32>} : memref<2x16xf32, #tpu.memory_space<vmem>>, vector<2x16xf32>,
    } else {
    }
    return
  }
  func.func @transform_0(%arg0: i32, %arg1: i32) -> i32 {
    %c0_i32 = arith.constant 0 : i32
    %c0_i32_0 = arith.constant 0 : i32
    return %c0_i32 : i32
  }
  func.func @transform_1(%arg0: i32, %arg1: i32) -> (i32, i32, i32) {
    %c0_i32 = arith.constant 0 : i32
    %c0_i32_0 = arith.constant 0 : i32
    return %arg0, %c0_i32, %arg1 : i32, i32, i32
  }
  func.func @transform_2(%arg0: i32, %arg1: i32) -> (i32, i32) {
    %c0_i32 = arith.constant 0 : i32
    %c0_i32_0 = arith.constant 0 : i32
    return %arg0, %c0_i32 : i32, i32
  }
}

</mosaic_0001>

<llo_original>
// kernel: tpu_custom_call.1
$region0: #{tpu_custom_call.1}
  #allocation0 [shape = 'u32[]', space=smem, size = 0x4, offset = 0x4, fixed_abs, tag = 'smem constant byte address 0x4 - core index']
  #allocation1 [shape = 'u32[144,128]{1,0:T(1,128)}', space=vmem, size = 0x12000, scoped, tag = 'internal scratch']
  #allocation2 [shape = 'f32[2,16]{1,0:T(2,128)}', space=vmem, size = 0x400, scoped, tag = 'scratch operand']
  #allocation3 [shape = 'f32[2,18]{1,0:T(2,128)}', space=vmem, size = 0x400, scoped, tag = 'scratch operand']
  %s0 = inlined_call_operand.hbm [shape: f32[3], index: 0, kind: input, shape index: {}]
  %s1 = inlined_call_operand.hbm [shape: f32[2,16,256], index: 1, kind: input, shape index: {}]
  %s2 = inlined_call_operand.hbm [shape: f32[2,16], index: 2, kind: output, shape index: {}]
  %s3 = sld [smem:[#allocation0]]
  $region34: #{tpu_custom_call.1} parent=0
    _
  %s5 = ssub.s32 1, %s3
  %s6 = scalar_select 0, %s5, %s3
  $region1: #{tpu_custom_call.1} parent=0
    #allocation4 [shape = 'u8[512]{0}', space=smem, size = 0x200, scoped, tag = 'input window, operand 0, single buffered']
    #allocation5 [shape = 's32[1]{0}', space=sflag, size = 0x4, scoped, tag = 'scoped memory for tpu_custom_call.1']
    #allocation6 [shape = 's32[1]{0}', space=sflag, size = 0x4, scoped, tag = 'scoped memory for tpu_custom_call.1']
    #allocation7 [shape = 's32[1]{0}', space=sflag, size = 0x4, scoped, tag = 'scoped memory for tpu_custom_call.1']
    #allocation8 [shape = 'u8[32768]{0}', space=vmem, size = 0x8000, scoped, tag = 'input window, operand 1, single buffered']
    #allocation9 [shape = 'u8[1024]{0}', space=vmem, size = 0x400, scoped, tag = 'output window, operand 0, single buffered']
    %7 = vsyncpa [#allocation7], 0
    %8 = vsyncpa [#allocation5], 0
    %9 = vsyncpa [#allocation6], 0
    // Predicated region
    $region2: #{tpu_custom_call.1} parent=1 // pred_check
      _
    $region3: #{tpu_custom_call.1} parent=1 // pred_check_branch
      %11 = sbr.rel (0) target = $region5
    $region4: #{tpu_custom_call.1} parent=1 // pred_region
      %s13 = ssub.s32 16, 16
      %14 = vsyncadd [#allocation7], %s13
      %17 = dma.hbm_to_smem %s0, 16, [#allocation4], [#allocation7]
    $region5: #{tpu_custom_call.1} parent=1 // pred_fallthru
      _
    // Predicated region
    $region6: #{tpu_custom_call.1} parent=1 // pred_check
      _
    $region7: #{tpu_custom_call.1} parent=1 // pred_check_branch
      %19 = sbr.rel (0) target = $region9
    $region8: #{tpu_custom_call.1} parent=1 // pred_region
      %s21 = ssub.s32 1024, 1024
      %22 = vsyncadd [#allocation5], %s21
      %s23 = sshll.u32 [#allocation8], 4
      %s24 = int_to_ptr.vmem [resolvable:$true] %s23
      %29 = dma.hbm_to_vmem [thread:$0]  %s1, 1024, %s24, [#allocation5], 256, 256, 16
    $region9: #{tpu_custom_call.1} parent=1 // pred_fallthru
      _
    // Predicated region
    $region10: #{tpu_custom_call.1} parent=1 // pred_check
      _
    $region11: #{tpu_custom_call.1} parent=1 // pred_check_branch
      %31 = sbr.rel (0) target = $region13
    $region12: #{tpu_custom_call.1} parent=1 // pred_region
      %32 = dma.done [#allocation7], 16
    $region13: #{tpu_custom_call.1} parent=1 // pred_fallthru
      _
    // Predicated region
    $region14: #{tpu_custom_call.1} parent=1 // pred_check
      _
    $region15: #{tpu_custom_call.1} parent=1 // pred_check_branch
      %34 = sbr.rel (0) target = $region17
    $region16: #{tpu_custom_call.1} parent=1 // pred_region
      %35 = dma.done [#allocation5], 1024
    $region17: #{tpu_custom_call.1} parent=1 // pred_fallthru
      _
    %36 = sfence
    %p37 = scmp.eq.s32.totalorder 0, 0
    // Predicated region
    $region18: #{tpu_custom_call.1} parent=1 // pred_check
      %p38 = pneg %p37
    $region19: #{tpu_custom_call.1} parent=1 // pred_check_branch
      %40 = sbr.rel (%p38) target = $region21
    $region20: #{tpu_custom_call.1} parent=1 // pred_region
      %vm41 = vcmask 123904
      %42 = vst.msk [vmem:[#allocation2] sm:$0x3] %vm41, 0.0
    $region21: #{tpu_custom_call.1} parent=1 // pred_fallthru
      _
    %v43 = vld [vmem:[#allocation8] sm:$0xff]
    %v44 = vld [vmem:[#allocation8 + $0x8] sm:$0xff]
    %v45 = vld [vmem:[#allocation8 + $0x10] sm:$0xff]
    %v46 = vld [vmem:[#allocation8 + $0x18] sm:$0xff]
    %v47 = vld [vmem:[#allocation8 + $0x20] sm:$0xff]
    %v48 = vld [vmem:[#allocation8 + $0x28] sm:$0xff]
    %v49 = vld [vmem:[#allocation8 + $0x30] sm:$0xff]
    %v50 = vld [vmem:[#allocation8 + $0x38] sm:$0xff]
    %v51 = vld [vmem:[#allocation2] sm:$0x3]
    %v52 = vadd.f32 %v43, %v44
    %53 = vadd.xlane.f32.xlu0 %v52
    %v54 = vpop.xlane.xlu0 %53
    %v55 = vadd.f32 %v45, %v46
    %56 = vadd.xlane.f32.xlu0 %v55
    %v57 = vpop.xlane.xlu0 %56
    %v58 = vadd.f32 %v47, %v48
    %59 = vadd.xlane.f32.xlu0 %v58
    %v60 = vpop.xlane.xlu0 %59
    %v61 = vadd.f32 %v49, %v50
    %62 = vadd.xlane.f32.xlu0 %v61
    %v63 = vpop.xlane.xlu0 %62
    %v68 = vlaneseq
    %v69 = vand.u32 %v68, 127
    %v70 = vlaneseq
    %v71 = vshrl.u32 %v70, 7
    %v72 = vsub.s32 %v69, %v71
    %v73 = vrot.slane %v54, %v72
    %v74 = vadd.s32 %v69, 4294967288
    %v75 = vlaneseq
    %v76 = vshrl.u32 %v75, 7
    %v77 = vsub.s32 %v74, %v76
    %v78 = vrot.slane %v57, %v77
    %vm79 = vcmask 130112
    %v80 = vsel %vm79, %v78, %v73
    %v81 = vlaneseq
    %v82 = vshrl.u32 %v81, 7
    %v83 = vsub.s32 %v69, %v82
    %v84 = vrot.slane %v60, %v83
    %v85 = vlaneseq
    %v86 = vshrl.u32 %v85, 7
    %v87 = vsub.s32 %v74, %v86
    %v88 = vrot.slane %v63, %v87
    %v89 = vsel %vm79, %v88, %v84
    %vm90 = vcmask 1041409
    %v91 = vsel %vm90, %v89, %v80
    %v93 = vadd.f32 %v51, %v91
    %vm94 = vcmask 123904
    %95 = vst.msk [vmem:[#allocation2] sm:$0x3] %vm94, %v93
    // Predicated region
    $region22: #{tpu_custom_call.1} parent=1 // pred_check
      %p96 = pneg %p37
    $region23: #{tpu_custom_call.1} parent=1 // pred_check_branch
      %98 = sbr.rel (%p96) target = $region25
    $region24: #{tpu_custom_call.1} parent=1 // pred_region
      %v99 = vld [vmem:[#allocation2] sm:$0x3]
      %v100 = vmul.f32 %v99, 0.00390625
      %vm101 = vcmask 140288
      %102 = vst.msk [vmem:[#allocation3] sm:$0x3] %vm101, 0.0
      %104 = vrot.lane.b32.xlu0 %v100, 1
      %v105 = vpop.permute.xlu0 %104
      %vm107 = vcmask 132104
      %108 = vst.msk [vmem:[#allocation3] sm:$0x3] %vm107, %v105
      %s109 = sld [smem:[#allocation4]]
      %v110 = vld [vmem:[#allocation3] sm:$0x3]
      %v111 = vstv %s109
      %v112 = vmul.f32 %v111, %v110
      %v113 = vadd.f32 %v112, 0.0
      %s114 = sld [smem:[#allocation4 + $0x1]]
      %v115 = vstv %s114
      %v116 = vmul.f32 %v115, %v110
      %118 = vrot.lane.b32.xlu0 %v116, 127
      %v119 = vpop.permute.xlu0 %118
      %v121 = vadd.f32 %v113, %v119
      %s122 = sld [smem:[#allocation4 + $0x2]]
      %v123 = vstv %s122
      %v124 = vmul.f32 %v123, %v110
      %126 = vrot.lane.b32.xlu0 %v124, 126
      %v127 = vpop.permute.xlu0 %126
      %v129 = vadd.f32 %v121, %v127
      %v130 = vxor.u32 %v129, 2147483648
      %v131 = vmul.f32 %v130, 1.442695
      %v132 = vpow.pop %v131
      %v133 = vadd.f32 %v132, 1.0
      %v134 = vrcp.pop %v133
      %v135 = vmul.f32 1.0, %v134
      %136 = vst.msk [vmem:[#allocation9] sm:$0x3] %vm94, %v135
    $region25: #{tpu_custom_call.1} parent=1 // pred_fallthru
      _
    // Predicated region
    $region26: #{tpu_custom_call.1} parent=1 // pred_check
      _
    $region27: #{tpu_custom_call.1} parent=1 // pred_check_branch
      %138 = sbr.rel (0) target = $region29
    $region28: #{tpu_custom_call.1} parent=1 // pred_region
      %s140 = ssub.s32 32, 32
      %141 = vsyncadd [#allocation6], %s140
      %s143 = sshll.u32 [#allocation9], 4
      %s144 = int_to_ptr.vmem [resolvable:$true] %s143
      %146 = dma.vmem_to_hbm [thread:$0]  %s144, 32, %s2, [#allocation6]
    $region29: #{tpu_custom_call.1} parent=1 // pred_fallthru
      _
    // Predicated region
    $region30: #{tpu_custom_call.1} parent=1 // pred_check
      _
    $region31: #{tpu_custom_call.1} parent=1 // pred_check_branch
      %148 = sbr.rel (0) target = $region33
    $region32: #{tpu_custom_call.1} parent=1 // pred_region
      %149 = dma.done [#allocation6], 32
    $region33: #{tpu_custom_call.1} parent=1 // pred_fallthru
      _
    %150 = vsyncpa [#allocation5], 1
    %151 = vsyncpa [#allocation6], 1
    %152 = vsyncpa [#allocation7], 1

</llo_original>
